<compile_context>
chip_gen: v5e
topology: v5e:2x2
jax: 0.10.0
libtpu: 0.0.40
codegen_flags: <defaults>
</compile_context>

<pallas_src>
import functools
import math

import jax
import jax.numpy as jnp
from jax.experimental import pallas as pl
from jax.experimental.pallas import tpu as pltpu

_EPS = 1e-5
_LANES = 128
_MAX_FOLDED_WIDTH = 512   # keeps the block-diag matmul memory-bound on v5e/v6e/v7x


# ----------------------------------------------------------------------------
# Kernels
# ----------------------------------------------------------------------------
def _plain_kernel(x_ref, w_ref, b_ref, o_ref):
    # x_ref: (tm, C); w_ref / b_ref: (1, C).
    x = x_ref[...].astype(jnp.float32)
    mu = jnp.mean(x, axis=-1, keepdims=True)
    xc = x - mu
    var = jnp.mean(xc * xc, axis=-1, keepdims=True)        # biased (divide by C)
    inv = jax.lax.rsqrt(var + _EPS)
    w = w_ref[...].astype(jnp.float32)
    b = b_ref[...].astype(jnp.float32)
    # (x - mu) * inv * w + b  ==  xc * (inv * w) + b   (keeps live set small)
    o_ref[...] = (xc * (inv * w) + b).astype(o_ref.dtype)


def _split_hi_lo(x):
    """f32 -> (hi, lo) bf16 pair with hi + lo ~= x to ~16-17 mantissa bits."""
    hi = x.astype(jnp.bfloat16)
    lo = (x - hi.astype(jnp.float32)).astype(jnp.bfloat16)
    return hi, lo


def _lane_dense_kernel(x_ref, w_ref, b_ref, seg_ref, o_ref, *, inv_c):
    # x_ref: (tm, kc) with g = kc // C logical rows folded into the lane axis.
    # w_ref / b_ref: (1, kc) = weight / bias tiled g times.
    # seg_ref: (kc, kc) bf16 block-diagonal of exact ones: seg[i, j] == 1 iff
    #          lanes i and j belong to the same length-C segment.  One matmul
    #          both sums within segments and broadcasts back to every lane.
    x = x_ref[...].astype(jnp.float32)
    seg = seg_ref[...]

    # Manual hi/lo bf16 split of the LHS: 2 DEFAULT-precision MXU passes per
    # statistic instead of ~6 with Precision.HIGHEST, at ~f32 accuracy.
    x_hi, x_lo = _split_hi_lo(x)
    mu = (jnp.dot(x_hi, seg, preferred_element_type=jnp.float32)
          + jnp.dot(x_lo, seg, preferred_element_type=jnp.float32)) * inv_c

    xc = x - mu
    sq = xc * xc
    sq_hi, sq_lo = _split_hi_lo(sq)
    var = (jnp.dot(sq_hi, seg, preferred_element_type=jnp.float32)
           + jnp.dot(sq_lo, seg, preferred_element_type=jnp.float32)) * inv_c

    inv = jax.lax.rsqrt(var + _EPS)
    w = w_ref[...].astype(jnp.float32)
    b = b_ref[...].astype(jnp.float32)
    o_ref[...] = (xc * (inv * w) + b).astype(o_ref.dtype)


# ----------------------------------------------------------------------------
# Generation-aware tiling
# ----------------------------------------------------------------------------
def _chip_config():
    """Per-generation tiling knobs (num TensorCores, block bytes, VMEM limit)."""
    kind = ""
    try:
        kind = jax.devices()[0].device_kind.lower()
    except Exception:
        pass
    if "v7" in kind or "7x" in kind:
        # 2 TCs, 64 MiB VMEM/TC, ~3.2 TB/s HBM.
        return {"num_tc": 2, "target_block_bytes": 3 << 20, "vmem_limit_bytes": 48 << 20}
    if "v6" in kind:
        # 1 TC, 128 MiB VMEM: big blocks, no grid-step cap.
        return {"num_tc": 1, "target_block_bytes": 7 << 20, "vmem_limit_bytes": 64 << 20}
    if "v5e" in kind or ("v5" in kind and "lite" in kind):
        # 1 TC, 128 MiB VMEM (default scoped limit is only 16 MiB -> lift it).
        return {"num_tc": 1, "target_block_bytes": 4 << 20, "vmem_limit_bytes": 64 << 20}
    # Unknown / megacore chips (v4, v5p, interpret): conservative defaults.
    return {"num_tc": 2, "target_block_bytes": 4 << 20, "vmem_limit_bytes": 48 << 20}


def _pick_tm(rows, row_bytes, target_bytes, sublane, num_tc):
    """Rows per block: ~target_bytes f32 working set, multiple of the dtype's
    minimum sublane tile; only cap the step count on multi-TC chips so both
    TensorCores get balanced work under dimension_semantics=('parallel',)."""
    if rows <= sublane:
        return rows                       # block == full array dim (allowed)
    tm = max(sublane, (target_bytes // max(row_bytes, 1)) // sublane * sublane)
    tm = min(tm, (rows // sublane) * sublane)
    if num_tc > 1:
        min_steps = 2 * num_tc            # >= 2 balanced steps per TensorCore
        if rows >= min_steps * sublane:
            tm = min(tm, max(sublane, (rows // min_steps) // sublane * sublane))
    return max(tm, sublane)


# ----------------------------------------------------------------------------
# Wrapper
# ----------------------------------------------------------------------------
def withbias_layernorm(x, weight, bias):
    """LayerNorm over the last dim of x with affine weight/bias (eps=1e-5)."""
    orig_shape = x.shape
    C = orig_shape[-1]
    assert weight.shape == (C,) and bias.shape == (C,)

    cfg = _chip_config()
    itemsize = jnp.dtype(x.dtype).itemsize
    sublane = max(8, 32 // itemsize)      # 8 f32 / 16 bf16 / 32 int8-fp8

    x2 = x.reshape(-1, C)
    M = x2.shape[0]

    # Lane-dense fold: smallest g with (g*C) % 128 == 0, capped so the
    # block-diag matmul stays under the HBM roofline on every generation.
    g = 1
    if C < _LANES:
        cand = _LANES // math.gcd(C, _LANES)
        if cand * C <= _MAX_FOLDED_WIDTH:
            g = cand

    if g > 1:
        pad = (-M) % g                                    # ragged M: pad a few rows
        xp = jnp.pad(x2, ((0, pad), (0, 0))) if pad else x2
        rows, width = (M + pad) // g, g * C
        xk = xp.reshape(rows, width)                      # free row-major reshape
        wk = jnp.tile(weight, g).reshape(1, width)
        bk = jnp.tile(bias, g).reshape(1, width)
        seg_id = jnp.arange(width, dtype=jnp.int32) // C
        seg = (seg_id[:, None] == seg_id[None, :]).astype(jnp.bfloat16)  # exact 0/1
        kernel = functools.partial(_lane_dense_kernel, inv_c=float(1.0 / C))
        extra_inputs = [seg]
        extra_specs = [pl.BlockSpec((width, width), lambda i: (0, 0))]   # resident
    else:
        pad = 0
        rows, width = M, C
        xk = x2
        wk = weight.reshape(1, C)
        bk = bias.reshape(1, C)
        kernel = _plain_kernel
        extra_inputs, extra_specs = [], []

    # Size the row tile by the f32 working set (f32 temporaries dominate VMEM).
    tm = _pick_tm(rows, width * 4, cfg["target_block_bytes"], sublane, cfg["num_tc"])
    grid = (pl.cdiv(rows, tm),)           # ragged last block is clipped; no jnp.pad

    matmul_flops = 8 * rows * width * width if g > 1 else 0
    cost = pl.CostEstimate(
        flops=int(8 * rows * width + matmul_flops),
        transcendentals=int(rows * (width if g > 1 else 1)),
        bytes_accessed=int(2 * rows * width * itemsize
                           + 2 * C * jnp.dtype(weight.dtype).itemsize),
    )

    out = pl.pallas_call(
        kernel,
        out_shape=jax.ShapeDtypeStruct((rows, width), x.dtype),
        grid_spec=pltpu.PrefetchScalarGridSpec(
            num_scalar_prefetch=0,
            grid=grid,
            in_specs=[
                pl.BlockSpec((tm, width), lambda i: (i, 0)),
                pl.BlockSpec((1, width), lambda i: (0, 0)),
                pl.BlockSpec((1, width), lambda i: (0, 0)),
            ] + extra_specs,
            out_specs=pl.BlockSpec((tm, width), lambda i: (i, 0)),
        ),
        compiler_params=pltpu.CompilerParams(
            dimension_semantics=("parallel",),
            vmem_limit_bytes=cfg["vmem_limit_bytes"],
        ),
        cost_estimate=cost,
    )(xk, wk, bk, *extra_inputs)

    out = out.reshape(-1, C)
    if pad:
        out = out[:M]
    return out.reshape(orig_shape)


# ----------------------------------------------------------------------------
# Reference + tests
# ----------------------------------------------------------------------------
def _reference_layernorm(x, weight, bias):
    x32 = x.astype(jnp.float32)
    mu = jnp.mean(x32, axis=-1, keepdims=True)
    var = jnp.mean((x32 - mu) ** 2, axis=-1, keepdims=True)
    return (x32 - mu) / jnp.sqrt(var + 1e-5) * weight.astype(jnp.float32) \
        + bias.astype(jnp.float32)


if __name__ == "__main__":
    key = jax.random.PRNGKey(0)
    k1, k2, k3, k4, k5 = jax.random.split(key, 5)

    # Test 1: C=32 divides 128 -> lane-dense path (g=4, kc=128).
    B, H, W, C = 2, 16, 16, 32
    x1 = jax.random.normal(k1, (B, H, W, C), dtype=jnp.float32)
    w1 = 1.0 + 0.1 * jax.random.normal(k2, (C,), dtype=jnp.float32)
    b1 = 0.1 * jax.random.normal(k3, (C,), dtype=jnp.float32)
    y1 = jax.block_until_ready(withbias_layernorm(x1, w1, b1))
    assert y1.shape == x1.shape
    err1 = jnp.max(jnp.abs(y1.astype(jnp.float32) - _reference_layernorm(x1, w1, b1)))
    assert err1 < 2e-3, f"lane-dense (C=32) mismatch: {err1}"

    # Test 2: C=96 (does not divide 128) and ragged M -> widened fold
    # (g=4, kc=384) with a 2-row pad; exercises the clipped last grid block.
    C2 = 96
    x2 = jax.random.normal(k4, (2, 37, C2), dtype=jnp.float32)
    w2 = jnp.ones((C2,), dtype=jnp.float32)    # module default init
    b2 = jnp.zeros((C2,), dtype=jnp.float32)
    y2 = jax.block_until_ready(withbias_layernorm(x2, w2, b2))
    assert y2.shape == x2.shape
    err2 = jnp.max(jnp.abs(y2.astype(jnp.float32) - _reference_layernorm(x2, w2, b2)))
    assert err2 < 2e-3, f"lane-dense (C=96) mismatch: {err2}"

    # Test 3: C=256 (>=128) bf16 -> plain path, 16-row sublane tile.
    C3 = 256
    x3 = jax.random.normal(k5, (4, 40, C3), dtype=jnp.bfloat16)
    w3 = jnp.ones((C3,), dtype=jnp.float32)
    b3 = jnp.zeros((C3,), dtype=jnp.float32)
    y3 = jax.block_until_ready(withbias_layernorm(x3, w3, b3))
    assert y3.shape == x3.shape and y3.dtype == x3.dtype
    err3 = jnp.max(jnp.abs(y3.astype(jnp.float32) - _reference_layernorm(x3, w3, b3)))
    assert err3 < 5e-2, f"plain bf16 path mismatch: {err3}"

    print("KERNEL_OK")
</pallas_src>

<mosaic_0001>
module attributes {stable_mosaic.version = 11 : i64} {
  func.func @_lane_dense_kernel(%arg0: i32, %arg1: memref<32x128xf32, #tpu.memory_space<vmem>>, %arg2: memref<1x128xf32, #tpu.memory_space<vmem>>, %arg3: memref<1x128xf32, #tpu.memory_space<vmem>>, %arg4: memref<128x128xbf16, #tpu.memory_space<vmem>>, %arg5: memref<32x128xf32, #tpu.memory_space<vmem>>) attributes {dimension_semantics = [#tpu.dimension_semantics<parallel>], iteration_bounds = array<i64: 4>, scalar_prefetch = 0 : i64, scratch_operands = 0 : i64, tpu.core_type = #tpu.core_type<tc>, window_params = [{transform_indices = @transform_0, window_bounds = array<i64: 32, 128>}, {pipeline_mode = #tpu.pipeline_mode<synchronous>, transform_indices = @transform_1, window_bounds = array<i64: 1, 128>}, {pipeline_mode = #tpu.pipeline_mode<synchronous>, transform_indices = @transform_2, window_bounds = array<i64: 1, 128>}, {pipeline_mode = #tpu.pipeline_mode<synchronous>, transform_indices = @transform_3, window_bounds = array<i64: 128, 128>}, {transform_indices = @transform_4, window_bounds = array<i64: 32, 128>}]} {
    %c0 = arith.constant 0 : index
    %c0_0 = arith.constant 0 : index
    %0 = vector.load %arg1[%c0, %c0_0] : memref<32x128xf32, #tpu.memory_space<vmem>>, vector<32x128xf32>
    %c0_1 = arith.constant 0 : index
    %c0_2 = arith.constant 0 : index
    %1 = vector.load %arg4[%c0_1, %c0_2] : memref<128x128xbf16, #tpu.memory_space<vmem>>, vector<128x128xbf16>
    %2 = arith.truncf %0 : vector<32x128xf32> to vector<32x128xbf16>
    %3 = arith.extf %2 : vector<32x128xbf16> to vector<32x128xf32>
    %4 = arith.subf %0, %3 : vector<32x128xf32>
    %5 = arith.truncf %4 : vector<32x128xf32> to vector<32x128xbf16>
    %cst = arith.constant dense<0.000000e+00> : vector<32x128xf32>
    %6 = tpu.matmul %2, %1, %cst {dimension_numbers = #tpu.dot_dimension_numbers<[1], [0], [0], [1], [0, 0, 1, 1], [], []>} : vector<32x128xbf16>, vector<128x128xbf16>, vector<32x128xf32> -> vector<32x128xf32>
    %cst_3 = arith.constant dense<0.000000e+00> : vector<32x128xf32>
    %7 = tpu.matmul %5, %1, %cst_3 {dimension_numbers = #tpu.dot_dimension_numbers<[1], [0], [0], [1], [0, 0, 1, 1], [], []>} : vector<32x128xbf16>, vector<128x128xbf16>, vector<32x128xf32> -> vector<32x128xf32>
    %8 = arith.addf %6, %7 : vector<32x128xf32>
    %cst_4 = arith.constant 3.125000e-02 : f32
    %9 = vector.broadcast %cst_4 : f32 to vector<32x128xf32>
    %10 = arith.mulf %8, %9 : vector<32x128xf32>
    %11 = arith.subf %0, %10 : vector<32x128xf32>
    %12 = arith.mulf %11, %11 : vector<32x128xf32>
    %13 = arith.truncf %12 : vector<32x128xf32> to vector<32x128xbf16>
    %14 = arith.extf %13 : vector<32x128xbf16> to vector<32x128xf32>
    %15 = arith.subf %12, %14 : vector<32x128xf32>
    %16 = arith.truncf %15 : vector<32x128xf32> to vector<32x128xbf16>
    %cst_5 = arith.constant dense<0.000000e+00> : vector<32x128xf32>
    %17 = tpu.matmul %13, %1, %cst_5 {dimension_numbers = #tpu.dot_dimension_numbers<[1], [0], [0], [1], [0, 0, 1, 1], [], []>} : vector<32x128xbf16>, vector<128x128xbf16>, vector<32x128xf32> -> vector<32x128xf32>
    %cst_6 = arith.constant dense<0.000000e+00> : vector<32x128xf32>
    %18 = tpu.matmul %16, %1, %cst_6 {dimension_numbers = #tpu.dot_dimension_numbers<[1], [0], [0], [1], [0, 0, 1, 1], [], []>} : vector<32x128xbf16>, vector<128x128xbf16>, vector<32x128xf32> -> vector<32x128xf32>
    %19 = arith.addf %17, %18 : vector<32x128xf32>
    %cst_7 = arith.constant 3.125000e-02 : f32
    %20 = vector.broadcast %cst_7 : f32 to vector<32x128xf32>
    %21 = arith.mulf %19, %20 : vector<32x128xf32>
    %cst_8 = arith.constant 9.99999974E-6 : f32
    %22 = vector.broadcast %cst_8 : f32 to vector<32x128xf32>
    %23 = arith.addf %21, %22 : vector<32x128xf32>
    %24 = math.rsqrt %23 : vector<32x128xf32>
    %c0_9 = arith.constant 0 : index
    %c0_10 = arith.constant 0 : index
    %25 = vector.load %arg2[%c0_9, %c0_10] : memref<1x128xf32, #tpu.memory_space<vmem>>, vector<1x128xf32>
    %c0_11 = arith.constant 0 : index
    %c0_12 = arith.constant 0 : index
    %26 = vector.load %arg3[%c0_11, %c0_12] : memref<1x128xf32, #tpu.memory_space<vmem>>, vector<1x128xf32>
    %27 = vector.broadcast %25 : vector<1x128xf32> to vector<32x128xf32>
    %28 = arith.mulf %24, %27 : vector<32x128xf32>
    %29 = arith.mulf %11, %28 : vector<32x128xf32>
    %30 = vector.broadcast %26 : vector<1x128xf32> to vector<32x128xf32>
    %31 = arith.addf %29, %30 : vector<32x128xf32>
    %c0_13 = arith.constant 0 : index
    %c0_14 = arith.constant 0 : index
    %32 = vector.load %arg5[%c0_13, %c0_14] : memref<32x128xf32, #tpu.memory_space<vmem>>, vector<32x128xf32>
    tpu.vector_store %arg5[%c0_13, %c0_14], %31 {strides = array<i32>} : memref<32x128xf32, #tpu.memory_space<vmem>>, vector<32x128xf32>,
    return
  }
  func.func @transform_0(%arg0: i32) -> (i32, i32) {
    %c0_i32 = arith.constant 0 : i32
    %c0_i32_0 = arith.constant 0 : i32
    return %arg0, %c0_i32 : i32, i32
  }
  func.func @transform_1(%arg0: i32) -> (i32, i32) {
    %c0_i32 = arith.constant 0 : i32
    %c0_i32_0 = arith.constant 0 : i32
    %c0_i32_1 = arith.constant 0 : i32
    return %c0_i32, %c0_i32_0 : i32, i32
  }
  func.func @transform_2(%arg0: i32) -> (i32, i32) {
    %c0_i32 = arith.constant 0 : i32
    %c0_i32_0 = arith.constant 0 : i32
    %c0_i32_1 = arith.constant 0 : i32
    return %c0_i32, %c0_i32_0 : i32, i32
  }
  func.func @transform_3(%arg0: i32) -> (i32, i32) {
    %c0_i32 = arith.constant 0 : i32
    %c0_i32_0 = arith.constant 0 : i32
    %c0_i32_1 = arith.constant 0 : i32
    return %c0_i32, %c0_i32_0 : i32, i32
  }
  func.func @transform_4(%arg0: i32) -> (i32, i32) {
    %c0_i32 = arith.constant 0 : i32
    %c0_i32_0 = arith.constant 0 : i32
    return %arg0, %c0_i32 : i32, i32
  }
}

</mosaic_0001>

<llo_original>
// kernel: tpu_custom_call.1
$region0: #{tpu_custom_call.1}
  #allocation0 [shape = 'u32[]', space=smem, size = 0x4, offset = 0x4, fixed_abs, tag = 'smem constant byte address 0x4 - core index']
  #allocation1 [shape = 'u32[72,128]{1,0:T(1,128)}', space=vmem, size = 0x9000, scoped, tag = 'internal scratch']
  %s0 = inlined_call_operand.hbm [shape: f32[128,128], index: 0, kind: input, shape index: {}]
  %s1 = inlined_call_operand.hbm [shape: f32[1,128], index: 1, kind: input, shape index: {}]
  %s2 = inlined_call_operand.vmem [shape: f32[1,128], index: 2, kind: input, shape index: {}]
  %s3 = inlined_call_operand.hbm [shape: bf16[128,128], index: 3, kind: input, shape index: {}]
  %s4 = inlined_call_operand.hbm [shape: f32[128,128], index: 4, kind: output, shape index: {}]
  %s5 = sld [smem:[#allocation0]]
  $region61: #{tpu_custom_call.1} parent=0
    _
  %s7 = ssub.s32 1, %s5
  %s8 = scalar_select 0, %s7, %s5
  $region1: #{tpu_custom_call.1} parent=0
    #allocation2 [shape = 'u8[32768]{0}', space=vmem, size = 0x8000, scoped, tag = 'input window, operand 0']
    #allocation3 [shape = 's32[2]{0}', space=sflag, size = 0x8, scoped, tag = 'scoped memory for tpu_custom_call.1']
    #allocation4 [shape = 's32[2]{0}', space=sflag, size = 0x8, scoped, tag = 'scoped memory for tpu_custom_call.1']
    #allocation5 [shape = 'u8[512]{0}', space=vmem, size = 0x400, scoped, tag = 'input window, operand 1, single buffered']
    #allocation6 [shape = 's32[1]{0}', space=sflag, size = 0x4, scoped, tag = 'scoped memory for tpu_custom_call.1']
    #allocation7 [shape = 'u8[32768]{0}', space=vmem, size = 0x8000, scoped, tag = 'input window, operand 3, single buffered']
    #allocation8 [shape = 'u8[32768]{0}', space=vmem, size = 0x8000, scoped, tag = 'output window, operand 0']
    %9 = vsyncpa [#allocation3], 0
    %s10 = scalar_lea.sflag [#allocation3], 1
    %11 = vsyncpa %s10, 0
    %12 = vsyncpa [#allocation6], 0
    %13 = vsyncpa [#allocation4], 0
    %s14 = scalar_lea.sflag [#allocation4], 1
    %15 = vsyncpa %s14, 0
    loop: start=0, step=1, limit=6
    $region2: #{tpu_custom_call.1} parent=1 // loop_pre_header
      _
    $region3: #{tpu_custom_call.1} parent=1 // loop_header
      %s17 = sphi 0, %s21
      %p18 = scmp.ge.s32.totalorder %s17, 6
      %s27 = sphi 0, %s29
      %s30 = sphi 0, %s27
      %s31 = sphi 0, %s30
      %s47 = sphi 0, %s31
      %s51 = sphi 0, %s51
      %s53 = sphi 0, %s51
      %s54 = sphi 0, %s53
      %s68 = sphi 0, %s54
      %s72 = sphi 0, %s72
      %s74 = sphi 0, %s72
      %s75 = sphi 0, %s74
      %s89 = sphi 0, %s75
      %s93 = sphi 0, %s93
      %s95 = sphi 0, %s93
      %s96 = sphi 0, %s95
      %s110 = sphi 0, %s96
      %s116 = sphi 0, %s118
      %s119 = sphi 0, %s116
      %s120 = sphi 0, %s119
      %s136 = sphi 0, %s120
    $region4: #{tpu_custom_call.1} parent=1 // loop_header_branch
      %20 = sbr.rel (%p18) target = $region8
    $region5: #{tpu_custom_call.1} parent=1 // loop_body
      %s22 = ssub.s32 %s17, 1
      %s23 = ssub.s32 %s17, 2
      %s24 = sadd.s32 %s17, 1
      %s25 = ssub.s32 %s17, %s24
      %p26 = scmp.eq.s32.totalorder %s25, 0
      %s28 = sadd.s32 %s27, 1
      %s29 = scalar_select %p26, %s27, %s28
      %p32 = pneg %p26
      %p33 = scmp.eq.s32.totalorder %s17, 3
      %p34 = por %p32, %p33
      %p35 = scmp.ne.s32.totalorder %s27, %s30
      %p36 = scmp.eq.s32.totalorder %s17, 0
      %p37 = por %p35, %p36
      %p38 = scmp.ne.s32.totalorder %s27, %s30
      %p39 = scmp.eq.s32.totalorder %s22, 3
      %p40 = por %p38, %p39
      %p41 = scmp.ne.s32.totalorder %s30, %s31
      %p42 = scmp.eq.s32.totalorder %s22, 0
      %p43 = por %p41, %p42
      %p44 = scmp.ne.s32.totalorder %s30, %s31
      %p45 = scmp.eq.s32.totalorder %s23, 3
      %p46 = por %p44, %p45
      %p48 = scmp.ne.s32.totalorder %s31, %s47
      %p49 = scmp.eq.s32.totalorder %s23, 0
      %p50 = por %p48, %p49
      %s52 = sadd.s32 %s51, 1
      %p55 = scmp.eq.s32.totalorder %s17, 3
      %p56 = scmp.ne.s32.totalorder %s51, %s53
      %p57 = scmp.eq.s32.totalorder %s17, 0
      %p58 = por %p56, %p57
      %p59 = scmp.ne.s32.totalorder %s51, %s53
      %p60 = scmp.eq.s32.totalorder %s22, 3
      %p61 = por %p59, %p60
      %p62 = scmp.ne.s32.totalorder %s53, %s54
      %p63 = scmp.eq.s32.totalorder %s22, 0
      %p64 = por %p62, %p63
      %p65 = scmp.ne.s32.totalorder %s53, %s54
      %p66 = scmp.eq.s32.totalorder %s23, 3
      %p67 = por %p65, %p66
      %p69 = scmp.ne.s32.totalorder %s54, %s68
      %p70 = scmp.eq.s32.totalorder %s23, 0
      %p71 = por %p69, %p70
      %s73 = sadd.s32 %s72, 1
      %p76 = scmp.eq.s32.totalorder %s17, 3
      %p77 = scmp.ne.s32.totalorder %s72, %s74
      %p78 = scmp.eq.s32.totalorder %s17, 0
      %p79 = por %p77, %p78
      %p80 = scmp.ne.s32.totalorder %s72, %s74
      %p81 = scmp.eq.s32.totalorder %s22, 3
      %p82 = por %p80, %p81
      %p83 = scmp.ne.s32.totalorder %s74, %s75
      %p84 = scmp.eq.s32.totalorder %s22, 0
      %p85 = por %p83, %p84
      %p86 = scmp.ne.s32.totalorder %s74, %s75
      %p87 = scmp.eq.s32.totalorder %s23, 3
      %p88 = por %p86, %p87
      %p90 = scmp.ne.s32.totalorder %s75, %s89
      %p91 = scmp.eq.s32.totalorder %s23, 0
      %p92 = por %p90, %p91
      %s94 = sadd.s32 %s93, 1
      %p97 = scmp.eq.s32.totalorder %s17, 3
      %p98 = scmp.ne.s32.totalorder %s93, %s95
      %p99 = scmp.eq.s32.totalorder %s17, 0
      %p100 = por %p98, %p99
      %p101 = scmp.ne.s32.totalorder %s93, %s95
      %p102 = scmp.eq.s32.totalorder %s22, 3
      %p103 = por %p101, %p102
      %p104 = scmp.ne.s32.totalorder %s95, %s96
      %p105 = scmp.eq.s32.totalorder %s22, 0
      %p106 = por %p104, %p105
      %p107 = scmp.ne.s32.totalorder %s95, %s96
      %p108 = scmp.eq.s32.totalorder %s23, 3
      %p109 = por %p107, %p108
      %p111 = scmp.ne.s32.totalorder %s96, %s110
      %p112 = scmp.eq.s32.totalorder %s23, 0
      %p113 = por %p111, %p112
      %s114 = ssub.s32 %s17, %s24
      %p115 = scmp.eq.s32.totalorder %s114, 0
      %s117 = sadd.s32 %s116, 1
      %s118 = scalar_select %p115, %s116, %s117
      %p121 = pneg %p115
      %p122 = scmp.eq.s32.totalorder %s17, 3
      %p123 = por %p121, %p122
      %p124 = scmp.ne.s32.totalorder %s116, %s119
      %p125 = scmp.eq.s32.totalorder %s17, 0
      %p126 = por %p124, %p125
      %p127 = scmp.ne.s32.totalorder %s116, %s119
      %p128 = scmp.eq.s32.totalorder %s22, 3
      %p129 = por %p127, %p128
      %p130 = scmp.ne.s32.totalorder %s119, %s120
      %p131 = scmp.eq.s32.totalorder %s22, 0
      %p132 = por %p130, %p131
      %p133 = scmp.ne.s32.totalorder %s119, %s120
      %p134 = scmp.eq.s32.totalorder %s23, 3
      %p135 = por %p133, %p134
      %p137 = scmp.ne.s32.totalorder %s120, %s136
      %p138 = scmp.eq.s32.totalorder %s23, 0
      %p139 = por %p137, %p138
      %p140 = scmp.le.s32.totalorder 1, %s17
      %p141 = scmp.lt.s32.totalorder %s17, 5
      %p142 = pnand %p140, %p141
      %p143 = pneg %p142
      // Predicated region
      $region9: #{tpu_custom_call.1} parent=5 // pred_check
        _
      $region10: #{tpu_custom_call.1} parent=5 // pred_check_branch
        %145 = sbr.rel (%p142) target = $region12
      $region11: #{tpu_custom_call.1} parent=5 // pred_region
        %s146 = ssub.s32 %s17, 1
        // Predicated region
        $region13: #{tpu_custom_call.1} parent=11 // pred_check
          %p147 = pneg %p64
        $region14: #{tpu_custom_call.1} parent=11 // pred_check_branch
          %149 = sbr.rel (%p147) target = $region16
        $region15: #{tpu_custom_call.1} parent=11 // pred_region
          %151 = vsyncadd [#allocation6], 0
          %s153 = sshll.u32 %s1, 4
          %s154 = int_to_ptr.hbm [resolvable:$true] %s153
          %s155 = sshll.u32 [#allocation5], 4
          %s156 = int_to_ptr.vmem [resolvable:$true] %s155
          %158 = dma.hbm_to_vmem [thread:$0]  %s154, 16, %s156, [#allocation6]
        $region16: #{tpu_custom_call.1} parent=11 // pred_fallthru
          _
        // Predicated region
        $region17: #{tpu_custom_call.1} parent=11 // pred_check
          %p159 = pneg %p85
        $region18: #{tpu_custom_call.1} parent=11 // pred_check_branch
          %161 = sbr.rel (%p159) target = $region20
        $region19: #{tpu_custom_call.1} parent=11 // pred_region
          _
        $region20: #{tpu_custom_call.1} parent=11 // pred_fallthru
          _
        // Predicated region
        $region21: #{tpu_custom_call.1} parent=11 // pred_check
          %p162 = pneg %p106
        $region22: #{tpu_custom_call.1} parent=11 // pred_check_branch
          %164 = sbr.rel (%p162) target = $region24
        $region23: #{tpu_custom_call.1} parent=11 // pred_region
          %166 = vsyncadd [#allocation6], 0
          %s167 = sshll.u32 %s3, 4
          %s168 = int_to_ptr.hbm [resolvable:$true] %s167
          %s169 = sshll.u32 [#allocation7], 4
          %s170 = int_to_ptr.vmem [resolvable:$true] %s169
          %175 = dma.hbm_to_vmem [thread:$0]  %s168, 1024, %s170, [#allocation6], 64, 64, 4
        $region24: #{tpu_custom_call.1} parent=11 // pred_fallthru
          _
      $region12: #{tpu_custom_call.1} parent=5 // pred_fallthru
        _
      %p176 = scmp.lt.s32.totalorder %s17, 4
      // Predicated region
      $region25: #{tpu_custom_call.1} parent=5 // pred_check
        %p177 = pneg %p176
      $region26: #{tpu_custom_call.1} parent=5 // pred_check_branch
        %179 = sbr.rel (%p177) target = $region28
      $region27: #{tpu_custom_call.1} parent=5 // pred_region
        // Predicated region
        $region29: #{tpu_custom_call.1} parent=27 // pred_check
          %p180 = pneg %p37
        $region30: #{tpu_custom_call.1} parent=27 // pred_check_branch
          %182 = sbr.rel (%p180) target = $region32
        $region31: #{tpu_custom_call.1} parent=27 // pred_region
          %s183 = sand.u32 %s27, 1
          %s184 = scalar_lea.sflag [#allocation3], %s183
          %s185 = sand.u32 %s27, 1
          %s186 = smul.addr %s185, 32
          %s187 = scalar_lea.vmem [#allocation2], %s186
          %s188 = smul.u32 4, %s17
          %190 = vsyncadd %s184, 0
          %s191 = smul.addr %s188, 8
          %s192 = scalar_lea.hbm %s0, %s191
          %s193 = sshll.u32 %s192, 4
          %s194 = int_to_ptr.hbm [resolvable:$true] %s193
          %s195 = sshll.u32 %s187, 4
          %s196 = int_to_ptr.vmem [resolvable:$true] %s195
          %201 = dma.hbm_to_vmem [thread:$0]  %s194, 512, %s196, %s184, 128, 128, 8
        $region32: #{tpu_custom_call.1} parent=27 // pred_fallthru
          _
      $region28: #{tpu_custom_call.1} parent=5 // pred_fallthru
        _
      %p202 = scmp.le.s32.totalorder 1, %s17
      %p203 = scmp.lt.s32.totalorder %s17, 5
      %p204 = pnand %p202, %p203
      %p205 = pneg %p204
      // Predicated region
      $region33: #{tpu_custom_call.1} parent=5 // pred_check
        _
      $region34: #{tpu_custom_call.1} parent=5 // pred_check_branch
        %207 = sbr.rel (%p204) target = $region36
      $region35: #{tpu_custom_call.1} parent=5 // pred_region
        %s208 = ssub.s32 %s17, 1
        %s209 = sand.u32 %s30, 1
        %s210 = scalar_lea.sflag [#allocation3], %s209
        %s211 = sand.u32 %s30, 1
        %s212 = smul.addr %s211, 32
        %s213 = scalar_lea.vmem [#allocation2], %s212
        // Predicated region
        $region37: #{tpu_custom_call.1} parent=35 // pred_check
          %p214 = pneg %p43
        $region38: #{tpu_custom_call.1} parent=35 // pred_check_branch
          %216 = sbr.rel (%p214) target = $region40
        $region39: #{tpu_custom_call.1} parent=35 // pred_region
          %218 = dma.done %s210, 512
        $region40: #{tpu_custom_call.1} parent=35 // pred_fallthru
          _
        // Predicated region
        $region41: #{tpu_custom_call.1} parent=35 // pred_check
          %p219 = pneg %p64
        $region42: #{tpu_custom_call.1} parent=35 // pred_check_branch
          %221 = sbr.rel (%p219) target = $region44
        $region43: #{tpu_custom_call.1} parent=35 // pred_region
          %223 = dma.done [#allocation6], 16
        $region44: #{tpu_custom_call.1} parent=35 // pred_fallthru
          _
        // Predicated region
        $region45: #{tpu_custom_call.1} parent=35 // pred_check
          %p224 = pneg %p106
        $region46: #{tpu_custom_call.1} parent=35 // pred_check_branch
          %226 = sbr.rel (%p224) target = $region48
        $region47: #{tpu_custom_call.1} parent=35 // pred_region
          %228 = dma.done [#allocation6], 1024
        $region48: #{tpu_custom_call.1} parent=35 // pred_fallthru
          _
        %s229 = sand.u32 %s30, 1
        %s230 = scalar_lea.sflag [#allocation3], %s229
        %s231 = sand.u32 %s30, 1
        %s232 = smul.addr %s231, 32
        %s233 = scalar_lea.vmem [#allocation2], %s232
        %p234 = pneg %p43
        %p235 = pneg %p40
        %p236 = pneg %p64
        %p237 = pneg %p61
        %p238 = pneg %p85
        %p239 = pneg %p82
        %p240 = pneg %p106
        %p241 = pneg %p103
        %p242 = pneg %p132
        %p243 = pneg %p129
        %s244 = sand.u32 %s119, 1
        %s245 = scalar_lea.sflag [#allocation4], %s244
        %s246 = sand.u32 %s119, 1
        %s247 = smul.addr %s246, 32
        %s248 = scalar_lea.vmem [#allocation8], %s247
        %s249 = smul.u32 4, %s22
        %s250 = smul.u32 4, %s22
        %v251 = vld [vmem:[%s213] sm:$0xff]
        %v252 = vld [vmem:[%s213 + $0x8] sm:$0xff]
        %v253 = vld [vmem:[%s213 + $0x10] sm:$0xff]
        %v254 = vld [vmem:[%s213 + $0x18] sm:$0xff]
        %v255 = vld [vmem:[#allocation7] sm:$0xf]
        %v256 = vld [vmem:[#allocation7 + $0x4] sm:$0xf]
        %v257 = vld [vmem:[#allocation7 + $0x8] sm:$0xf]
        %v258 = vld [vmem:[#allocation7 + $0xc] sm:$0xf]
        %v259 = vld [vmem:[#allocation7 + $0x10] sm:$0xf]
        %v260 = vld [vmem:[#allocation7 + $0x14] sm:$0xf]
        %v261 = vld [vmem:[#allocation7 + $0x18] sm:$0xf]
        %v262 = vld [vmem:[#allocation7 + $0x1c] sm:$0xf]
        %v263 = vld [vmem:[#allocation7 + $0x20] sm:$0xf]
        %v264 = vld [vmem:[#allocation7 + $0x24] sm:$0xf]
        %v265 = vld [vmem:[#allocation7 + $0x28] sm:$0xf]
        %v266 = vld [vmem:[#allocation7 + $0x2c] sm:$0xf]
        %v267 = vld [vmem:[#allocation7 + $0x30] sm:$0xf]
        %v268 = vld [vmem:[#allocation7 + $0x34] sm:$0xf]
        %v269 = vld [vmem:[#allocation7 + $0x38] sm:$0xf]
        %v270 = vld [vmem:[#allocation7 + $0x3c] sm:$0xf]
        %v271 = vpack.c.bf16 %v251, %v251
        %v272 = vpack.c.bf16 %v252, %v252
        %v273 = vpack.c.bf16 %v253, %v253
        %v274 = vpack.c.bf16 %v254, %v254
        %v275 = vunpack.c.l.bf16 %v271
        %v276 = vunpack.c.l.bf16 %v272
        %v277 = vunpack.c.l.bf16 %v273
        %v278 = vunpack.c.l.bf16 %v274
        %v279 = vsub.f32 %v251, %v275
        %v280 = vsub.f32 %v252, %v276
        %v281 = vsub.f32 %v253, %v277
        %v282 = vsub.f32 %v254, %v278
        %v283 = vpack.c.bf16 %v280, %v279
        %v284 = vpack.c.bf16 %v282, %v281
        %v301 = vunpack.c.l.b16 %v255
        %v302 = vunpack.c.l.b16 %v256
        %v303 = vunpack.c.l.b16 %v257
        %v304 = vunpack.c.l.b16 %v258
        %v305 = vunpack.c.l.b16 %v259
        %v306 = vunpack.c.l.b16 %v260
        %v307 = vunpack.c.l.b16 %v261
        %v308 = vunpack.c.l.b16 %v262
        %v309 = vunpack.c.l.b16 %v263
        %v310 = vunpack.c.l.b16 %v264
        %v311 = vunpack.c.l.b16 %v265
        %v312 = vunpack.c.l.b16 %v266
        %v313 = vunpack.c.l.b16 %v267
        %v314 = vunpack.c.l.b16 %v268
        %v315 = vunpack.c.l.b16 %v269
        %v316 = vunpack.c.l.b16 %v270
        %v317 = vpack.c.b16 %v302, %v301
        %v318 = vpack.c.b16 %v304, %v303
        %v319 = vpack.c.b16 %v306, %v305
        %v320 = vpack.c.b16 %v308, %v307
        %v321 = vpack.c.b16 %v310, %v309
        %v322 = vpack.c.b16 %v312, %v311
        %v323 = vpack.c.b16 %v314, %v313
        %v324 = vpack.c.b16 %v316, %v315
        %333 = vmatpush.bf16.msra.mxu0 %v324
        %334 = vmatpush.bf16.msra.mxu0 %v323
        %335 = vmatpush.bf16.msra.mxu0 %v322
        %336 = vmatpush.bf16.msra.mxu0 %v321
        %337 = vmatpush.bf16.msra.mxu0 %v320
        %338 = vmatpush.bf16.msra.mxu0 %v319
        %339 = vmatpush.bf16.msra.mxu0 %v318
        %340 = vmatpush.bf16.msra.mxu0 %v317
        %341 = vmatmul.bf16.gmra.mxu0 %v283
        %v342 = vpop.f32.mrf.mxu0
        %v343 = vadd.f32 0.0, %v342
        %v344 = vpop.f32.mrf.mxu0
        %v345 = vadd.f32 0.0, %v344
        %346 = vmatmul.bf16.gmra.mxu0 %v284
        %v347 = vpop.f32.mrf.mxu0
        %v348 = vadd.f32 0.0, %v347
        %v349 = vpop.f32.mrf.mxu0
        %v350 = vadd.f32 0.0, %v349
        %351 = vdwg.mxu0
        %v356 = vunpack.c.l.b16 %v271
        %v357 = vunpack.c.l.b16 %v272
        %v358 = vunpack.c.l.b16 %v273
        %v359 = vunpack.c.l.b16 %v274
        %v360 = vpack.c.b16 %v357, %v356
        %v361 = vpack.c.b16 %v359, %v358
        %364 = vmatpush.bf16.msra.mxu0 %v324
        %365 = vmatpush.bf16.msra.mxu0 %v323
        %366 = vmatpush.bf16.msra.mxu0 %v322
        %367 = vmatpush.bf16.msra.mxu0 %v321
        %368 = vmatpush.bf16.msra.mxu0 %v320
        %369 = vmatpush.bf16.msra.mxu0 %v319
        %370 = vmatpush.bf16.msra.mxu0 %v318
        %371 = vmatpush.bf16.msra.mxu0 %v317
        %372 = vmatmul.bf16.gmra.mxu0 %v360
        %v373 = vpop.f32.mrf.mxu0
        %v374 = vadd.f32 %v343, %v373
        %v375 = vpop.f32.mrf.mxu0
        %v376 = vadd.f32 %v345, %v375
        %377 = vmatmul.bf16.gmra.mxu0 %v361
        %v378 = vpop.f32.mrf.mxu0
        %v379 = vadd.f32 %v348, %v378
        %v380 = vpop.f32.mrf.mxu0
        %v381 = vadd.f32 %v350, %v380
        %382 = vdwg.mxu0
        %v383 = vmul.f32 %v374, 0.03125
        %v384 = vmul.f32 %v376, 0.03125
        %v385 = vmul.f32 %v379, 0.03125
        %v386 = vmul.f32 %v381, 0.03125
        %v387 = vsub.f32 %v251, %v383
        %v388 = vsub.f32 %v252, %v384
        %v389 = vsub.f32 %v253, %v385
        %v390 = vsub.f32 %v254, %v386
        %v391 = vmul.f32 %v387, %v387
        %v392 = vmul.f32 %v388, %v388
        %v393 = vmul.f32 %v389, %v389
        %v394 = vmul.f32 %v390, %v390
        %v395 = vpack.c.bf16 %v391, %v391
        %v396 = vpack.c.bf16 %v392, %v392
        %v397 = vpack.c.bf16 %v393, %v393
        %v398 = vpack.c.bf16 %v394, %v394
        %v399 = vunpack.c.l.bf16 %v395
        %v400 = vunpack.c.l.bf16 %v396
        %v401 = vunpack.c.l.bf16 %v397
        %v402 = vunpack.c.l.bf16 %v398
        %v403 = vsub.f32 %v391, %v399
        %v404 = vsub.f32 %v392, %v400
        %v405 = vsub.f32 %v393, %v401
        %v406 = vsub.f32 %v394, %v402
        %v407 = vpack.c.bf16 %v404, %v403
        %v408 = vpack.c.bf16 %v406, %v405
        %409 = vmatpush.bf16.msra.mxu0 %v324
        %410 = vmatpush.bf16.msra.mxu0 %v323
        %411 = vmatpush.bf16.msra.mxu0 %v322
        %412 = vmatpush.bf16.msra.mxu0 %v321
        %413 = vmatpush.bf16.msra.mxu0 %v320
        %414 = vmatpush.bf16.msra.mxu0 %v319
        %415 = vmatpush.bf16.msra.mxu0 %v318
        %416 = vmatpush.bf16.msra.mxu0 %v317
        %417 = vmatmul.bf16.gmra.mxu0 %v407
        %v418 = vpop.f32.mrf.mxu0
        %v419 = vadd.f32 0.0, %v418
        %v420 = vpop.f32.mrf.mxu0
        %v421 = vadd.f32 0.0, %v420
        %422 = vmatmul.bf16.gmra.mxu0 %v408
        %v423 = vpop.f32.mrf.mxu0
        %v424 = vadd.f32 0.0, %v423
        %v425 = vpop.f32.mrf.mxu0
        %v426 = vadd.f32 0.0, %v425
        %427 = vdwg.mxu0
        %v432 = vunpack.c.l.b16 %v395
        %v433 = vunpack.c.l.b16 %v396
        %v434 = vunpack.c.l.b16 %v397
        %v435 = vunpack.c.l.b16 %v398
        %v436 = vpack.c.b16 %v433, %v432
        %v437 = vpack.c.b16 %v435, %v434
        %440 = vmatpush.bf16.msra.mxu0 %v324
        %441 = vmatpush.bf16.msra.mxu0 %v323
        %442 = vmatpush.bf16.msra.mxu0 %v322
        %443 = vmatpush.bf16.msra.mxu0 %v321
        %444 = vmatpush.bf16.msra.mxu0 %v320
        %445 = vmatpush.bf16.msra.mxu0 %v319
        %446 = vmatpush.bf16.msra.mxu0 %v318
        %447 = vmatpush.bf16.msra.mxu0 %v317
        %448 = vmatmul.bf16.gmra.mxu0 %v436
        %v449 = vpop.f32.mrf.mxu0
        %v450 = vadd.f32 %v419, %v449
        %v451 = vpop.f32.mrf.mxu0
        %v452 = vadd.f32 %v421, %v451
        %453 = vmatmul.bf16.gmra.mxu0 %v437
        %v454 = vpop.f32.mrf.mxu0
        %v455 = vadd.f32 %v424, %v454
        %v456 = vpop.f32.mrf.mxu0
        %v457 = vadd.f32 %v426, %v456
        %458 = vdwg.mxu0
        %v459 = vmul.f32 %v450, 0.03125
        %v460 = vmul.f32 %v452, 0.03125
        %v461 = vmul.f32 %v455, 0.03125
        %v462 = vmul.f32 %v457, 0.03125
        %v463 = vadd.f32 %v459, 1e-05
        %v464 = vadd.f32 %v460, 1e-05
        %v465 = vadd.f32 %v461, 1e-05
        %v466 = vadd.f32 %v462, 1e-05
        %v467 = vrsqrt.pop %v463
        %v468 = vmul.f32 %v467, %v463
        %v469 = vmul.f32 %v468, %v467
        %v470 = vmul.f32 0.5, %v469
        %v471 = vsub.f32 1.5, %v470
        %v472 = vmul.f32 %v467, %v471
        %vm473 = vweird.f32 %v463
        %vm474 = vweird.f32 %v467
        %vm475 = vmor %vm473, %vm474
        %v476 = vsel %vm475, %v467, %v472
        %v477 = vrsqrt.pop %v464
        %v478 = vmul.f32 %v477, %v464
        %v479 = vmul.f32 %v478, %v477
        %v480 = vmul.f32 0.5, %v479
        %v481 = vsub.f32 1.5, %v480
        %v482 = vmul.f32 %v477, %v481
        %vm483 = vweird.f32 %v464
        %vm484 = vweird.f32 %v477
        %vm485 = vmor %vm483, %vm484
        %v486 = vsel %vm485, %v477, %v482
        %v487 = vrsqrt.pop %v465
        %v488 = vmul.f32 %v487, %v465
        %v489 = vmul.f32 %v488, %v487
        %v490 = vmul.f32 0.5, %v489
        %v491 = vsub.f32 1.5, %v490
        %v492 = vmul.f32 %v487, %v491
        %vm493 = vweird.f32 %v465
        %vm494 = vweird.f32 %v487
        %vm495 = vmor %vm493, %vm494
        %v496 = vsel %vm495, %v487, %v492
        %v497 = vrsqrt.pop %v466
        %v498 = vmul.f32 %v497, %v466
        %v499 = vmul.f32 %v498, %v497
        %v500 = vmul.f32 0.5, %v499
        %v501 = vsub.f32 1.5, %v500
        %v502 = vmul.f32 %v497, %v501
        %vm503 = vweird.f32 %v466
        %vm504 = vweird.f32 %v497
        %vm505 = vmor %vm503, %vm504
        %v506 = vsel %vm505, %v497, %v502
        %v507 = vld [vmem:[#allocation5] sm:$0x1]
        %v508 = vld [vmem:[%s2] sm:$0x1]
        %v510 = vperm.slane %v507, 0
        %v512 = vmul.f32 %v476, %v510
        %v513 = vmul.f32 %v486, %v510
        %v514 = vmul.f32 %v496, %v510
        %v515 = vmul.f32 %v506, %v510
        %v516 = vmul.f32 %v387, %v512
        %v517 = vmul.f32 %v388, %v513
        %v518 = vmul.f32 %v389, %v514
        %v519 = vmul.f32 %v390, %v515
        %v521 = vperm.slane %v508, 0
        %v523 = vadd.f32 %v516, %v521
        %v524 = vadd.f32 %v517, %v521
        %v525 = vadd.f32 %v518, %v521
        %v526 = vadd.f32 %v519, %v521
        %527 = vst [vmem:[%s248] sm:$0xff] %v523
        %528 = vst [vmem:[%s248 + $0x8] sm:$0xff] %v524
        %529 = vst [vmem:[%s248 + $0x10] sm:$0xff] %v525
        %530 = vst [vmem:[%s248 + $0x18] sm:$0xff] %v526
        %s531 = sand.u32 %s119, 1
        %s532 = scalar_lea.sflag [#allocation4], %s531
        %s533 = sand.u32 %s119, 1
        %s534 = smul.addr %s533, 32
        %s535 = scalar_lea.vmem [#allocation8], %s534
        // Predicated region
        $region49: #{tpu_custom_call.1} parent=35 // pred_check
          %p536 = pneg %p129
        $region50: #{tpu_custom_call.1} parent=35 // pred_check_branch
          %538 = sbr.rel (%p536) target = $region52
        $region51: #{tpu_custom_call.1} parent=35 // pred_region
          %s539 = smul.u32 4, %s22
          %541 = vsyncadd %s532, 0
          %s542 = smul.addr %s539, 8
          %s543 = scalar_lea.hbm %s4, %s542
          %s544 = sshll.u32 %s535, 4
          %s545 = int_to_ptr.vmem [resolvable:$true] %s544
          %s546 = sshll.u32 %s543, 4
          %s547 = int_to_ptr.hbm [resolvable:$true] %s546
          %552 = dma.vmem_to_hbm [thread:$0]  %s545, 512, %s547, %s532, 128, 128, 8
        $region52: #{tpu_custom_call.1} parent=35 // pred_fallthru
          _
      $region36: #{tpu_custom_call.1} parent=5 // pred_fallthru
        _
      %p553 = scmp.le.s32.totalorder 2, %s17
      // Predicated region
      $region53: #{tpu_custom_call.1} parent=5 // pred_check
        %p554 = pneg %p553
      $region54: #{tpu_custom_call.1} parent=5 // pred_check_branch
        %556 = sbr.rel (%p554) target = $region56
      $region55: #{tpu_custom_call.1} parent=5 // pred_region
        %s557 = ssub.s32 %s17, 2
        // Predicated region
        $region57: #{tpu_custom_call.1} parent=55 // pred_check
          %p558 = pneg %p135
        $region58: #{tpu_custom_call.1} parent=55 // pred_check_branch
          %560 = sbr.rel (%p558) target = $region60
        $region59: #{tpu_custom_call.1} parent=55 // pred_region
          %s561 = sand.u32 %s120, 1
          %s562 = scalar_lea.sflag [#allocation4], %s561
          %s563 = sand.u32 %s120, 1
          %s564 = smul.addr %s563, 32
          %s565 = scalar_lea.vmem [#allocation8], %s564
          %567 = dma.done %s562, 512
        $region60: #{tpu_custom_call.1} parent=55 // pred_fallthru
          _
      $region56: #{tpu_custom_call.1} parent=5 // pred_fallthru
        _
    $region6: #{tpu_custom_call.1} parent=1 // loop_footer
      %s21 = sadd.s32 1, %s17
    $region7: #{tpu_custom_call.1} parent=1 // loop_footer_branch
      %16 = sbr.rel target = $region3
    $region8: #{tpu_custom_call.1} parent=1 // loop_exit
      _
    %568 = vsyncpa [#allocation3], 1
    %s569 = scalar_lea.sflag [#allocation3], 1
    %570 = vsyncpa %s569, 1
    %571 = vsyncpa [#allocation6], 1
    %572 = vsyncpa [#allocation4], 1
    %s573 = scalar_lea.sflag [#allocation4], 1
    %574 = vsyncpa %s573, 1

</llo_original>
